<compile_context>
chip_gen: v6e
topology: v6e:2x2x1
jax: 0.10.0
libtpu: 0.0.40
codegen_flags: <defaults>
</compile_context>

<pallas_src>
import jax
import jax.numpy as jnp
from jax.experimental import pallas as pl
from jax.experimental.pallas import tpu as pltpu


def fused_linear_t_kernel(x_ref, w_ref, b_ref, o_ref):
    # (N, K) @ (K, TILE_B) + (N, 1) -> (N, TILE_B)   -- batch on the lane axis.
    y = jnp.dot(w_ref[...], x_ref[...], preferred_element_type=jnp.float32)
    o_ref[...] = (y + b_ref[...]).astype(o_ref.dtype)


def _round_up(x, m):
    return (x + m - 1) // m * m


def dummy_model_forward_fm(x_t, w1, b1, w2, b2, *,
                           tile_b_max=131072,
                           vmem_limit_bytes=32 * 1024 * 1024):
    """Feature-major fast path.

    x_t: (10, B) float32, weights in (in_features, out_features) layout.
    Returns (5, B).
    """
    K, B = x_t.shape
    N = w2.shape[1]

    # Fold the two affine layers (exact: no nonlinearity between them), transposed
    # for the feature-major kernel.
    w = jnp.dot(w1, w2, preferred_element_type=jnp.float32)            # (10, 5)
    b = jnp.dot(b1, w2, preferred_element_type=jnp.float32) + b2       # (1, 5)
    w_t = jnp.transpose(w).astype(x_t.dtype)                           # (5, 10)
    b_t = jnp.transpose(b).astype(x_t.dtype)                           # (5, 1)

    # Padding policy: lane-align B to 128.  If the batch spans multiple tiles,
    # clamp the tile so the total pad is <= grid_b * 128 rows (a fraction of a
    # percent), instead of rounding B up to a full tile.
    b128 = _round_up(B, 128)
    if b128 <= tile_b_max:
        tile_b = b128
        grid_b = 1
    else:
        grid_b = pl.cdiv(b128, tile_b_max)
        tile_b = _round_up(pl.cdiv(b128, grid_b), 128)
    b_padded = grid_b * tile_b
    if b_padded != B:
        x_t = jnp.pad(x_t, ((0, 0), (0, b_padded - B)))

    out = pl.pallas_call(
        fused_linear_t_kernel,
        out_shape=jax.ShapeDtypeStruct((N, b_padded), x_t.dtype),
        grid_spec=pltpu.PrefetchScalarGridSpec(
            num_scalar_prefetch=0,
            grid=(grid_b,),
            in_specs=[
                pl.BlockSpec((K, tile_b), lambda i: (0, i)),   # x_t: batch-tiled, lane-dense
                pl.BlockSpec((N, K), lambda i: (0, 0)),        # folded W^T: VMEM-resident
                pl.BlockSpec((N, 1), lambda i: (0, 0)),        # folded b^T: VMEM-resident
            ],
            out_specs=pl.BlockSpec((N, tile_b), lambda i: (0, i)),
        ),
        compiler_params=pltpu.CompilerParams(
            # "parallel" shards the batch axis across TCs where supported (v7x)
            # and is a no-op on single-TC chips (v5e/v6e).
            dimension_semantics=("parallel",),
            vmem_limit_bytes=vmem_limit_bytes,   # dense layout keeps tile_b=131072 under 32 MiB
        ),
    )(x_t, w_t, b_t)

    return out[:, :B]


def dummy_model_forward(x, w1, b1, w2, b2, **kwargs):
    """Module-compatible wrapper: x is (B, 10), returns (B, 5).

    The transposes below only exist to match the PyTorch (batch, feature) contract;
    producers/consumers that can adopt the feature-major layout should call
    dummy_model_forward_fm directly and skip them.
    """
    y_t = dummy_model_forward_fm(jnp.transpose(x), w1, b1, w2, b2, **kwargs)
    return jnp.transpose(y_t)


def init_params(key):
    # Deterministic synthetic init, mimicking PyTorch Linear's uniform(-1/sqrt(fan_in), +).
    k1, k2, k3, k4 = jax.random.split(key, 4)
    bound1 = 1.0 / jnp.sqrt(10.0)
    bound2 = 1.0 / jnp.sqrt(10.0)
    # stored as (in_features, out_features) — transposed vs. PyTorch's (out, in)
    w1 = jax.random.uniform(k1, (10, 10), jnp.float32, -bound1, bound1)
    b1 = jax.random.uniform(k2, (1, 10), jnp.float32, -bound1, bound1)
    w2 = jax.random.uniform(k3, (10, 5), jnp.float32, -bound2, bound2)
    b2 = jax.random.uniform(k4, (1, 5), jnp.float32, -bound2, bound2)
    return w1, b1, w2, b2


if __name__ == "__main__":
    key = jax.random.PRNGKey(0)
    kx, kp = jax.random.split(key)
    w1, b1, w2, b2 = init_params(kp)

    def reference(x):
        return (x @ w1 + b1) @ w2 + b2

    # 1) Small batch through the module-compatible (B, 10) -> (B, 5) wrapper.
    B = 8
    x = jax.random.normal(kx, (B, 10), jnp.float32)
    out = jax.block_until_ready(dummy_model_forward(x, w1, b1, w2, b2))
    assert out.shape == (B, 5)
    assert jnp.allclose(out, reference(x), atol=1e-5, rtol=1e-5)

    # 2) Ragged batch through the feature-major fast path (exercises lane padding).
    B2 = 13
    x2 = jax.random.normal(jax.random.PRNGKey(1), (B2, 10), jnp.float32)
    out2_t = jax.block_until_ready(
        dummy_model_forward_fm(jnp.transpose(x2), w1, b1, w2, b2))
    assert out2_t.shape == (5, B2)
    assert jnp.allclose(jnp.transpose(out2_t), reference(x2), atol=1e-5, rtol=1e-5)

    # 3) Multi-tile grid path (small tile_b_max override so the grid has 3 steps).
    B3 = 300
    x3 = jax.random.normal(jax.random.PRNGKey(2), (B3, 10), jnp.float32)
    out3 = jax.block_until_ready(
        dummy_model_forward(x3, w1, b1, w2, b2, tile_b_max=128))
    assert out3.shape == (B3, 5)
    assert jnp.allclose(out3, reference(x3), atol=1e-5, rtol=1e-5)

    print("KERNEL_OK")
</pallas_src>

<mosaic_0001>
module attributes {stable_mosaic.version = 11 : i64} {
  func.func @fused_linear_t_kernel(%arg0: i32, %arg1: memref<10x128xf32, #tpu.memory_space<vmem>>, %arg2: memref<5x10xf32, #tpu.memory_space<vmem>>, %arg3: memref<5x1xf32, #tpu.memory_space<vmem>>, %arg4: memref<5x128xf32, #tpu.memory_space<vmem>>) attributes {dimension_semantics = [#tpu.dimension_semantics<parallel>], iteration_bounds = array<i64: 1>, scalar_prefetch = 0 : i64, scratch_operands = 0 : i64, tpu.core_type = #tpu.core_type<tc>, window_params = [{transform_indices = @transform_0, window_bounds = array<i64: 10, 128>}, {pipeline_mode = #tpu.pipeline_mode<synchronous>, transform_indices = @transform_1, window_bounds = array<i64: 5, 10>}, {pipeline_mode = #tpu.pipeline_mode<synchronous>, transform_indices = @transform_2, window_bounds = array<i64: 5, 1>}, {transform_indices = @transform_3, window_bounds = array<i64: 5, 128>}]} {
    %c0 = arith.constant 0 : index
    %c0_0 = arith.constant 0 : index
    %0 = vector.load %arg2[%c0, %c0_0] : memref<5x10xf32, #tpu.memory_space<vmem>>, vector<5x10xf32>
    %c0_1 = arith.constant 0 : index
    %c0_2 = arith.constant 0 : index
    %1 = vector.load %arg1[%c0_1, %c0_2] : memref<10x128xf32, #tpu.memory_space<vmem>>, vector<10x128xf32>
    %cst = arith.constant dense<0.000000e+00> : vector<5x128xf32>
    %2 = tpu.matmul %0, %1, %cst {dimension_numbers = #tpu.dot_dimension_numbers<[1], [0], [0], [1], [0, 0, 1, 1], [], []>} : vector<5x10xf32>, vector<10x128xf32>, vector<5x128xf32> -> vector<5x128xf32>
    %c0_3 = arith.constant 0 : index
    %c0_4 = arith.constant 0 : index
    %3 = vector.load %arg3[%c0_3, %c0_4] : memref<5x1xf32, #tpu.memory_space<vmem>>, vector<5x1xf32>
    %4 = vector.broadcast %3 : vector<5x1xf32> to vector<5x128xf32>
    %5 = arith.addf %2, %4 : vector<5x128xf32>
    %c0_5 = arith.constant 0 : index
    %c0_6 = arith.constant 0 : index
    %6 = vector.load %arg4[%c0_5, %c0_6] : memref<5x128xf32, #tpu.memory_space<vmem>>, vector<5x128xf32>
    tpu.vector_store %arg4[%c0_5, %c0_6], %5 {strides = array<i32>} : memref<5x128xf32, #tpu.memory_space<vmem>>, vector<5x128xf32>,
    return
  }
  func.func @transform_0(%arg0: i32) -> (i32, i32) {
    %c0_i32 = arith.constant 0 : i32
    %c0_i32_0 = arith.constant 0 : i32
    return %c0_i32, %arg0 : i32, i32
  }
  func.func @transform_1(%arg0: i32) -> (i32, i32) {
    %c0_i32 = arith.constant 0 : i32
    %c0_i32_0 = arith.constant 0 : i32
    %c0_i32_1 = arith.constant 0 : i32
    return %c0_i32, %c0_i32_0 : i32, i32
  }
  func.func @transform_2(%arg0: i32) -> (i32, i32) {
    %c0_i32 = arith.constant 0 : i32
    %c0_i32_0 = arith.constant 0 : i32
    %c0_i32_1 = arith.constant 0 : i32
    return %c0_i32, %c0_i32_0 : i32, i32
  }
  func.func @transform_3(%arg0: i32) -> (i32, i32) {
    %c0_i32 = arith.constant 0 : i32
    %c0_i32_0 = arith.constant 0 : i32
    return %c0_i32, %arg0 : i32, i32
  }
}

</mosaic_0001>

<llo_original>
// kernel: tpu_custom_call.1
$region0: #{tpu_custom_call.1}
  #allocation0 [shape = 'u32[]', space=smem, size = 0x4, offset = 0x4, fixed_abs, tag = 'smem constant byte address 0x4 - core index']
  #allocation1 [shape = 'u32[144,128]{1,0:T(1,128)}', space=vmem, size = 0x12000, scoped, tag = 'internal scratch']
  %s0 = inlined_call_operand.hbm [shape: f32[10,128], index: 0, kind: input, shape index: {}]
  %s1 = inlined_call_operand.vmem [shape: f32[5,10], index: 1, kind: input, shape index: {}]
  %s2 = inlined_call_operand.vmem [shape: f32[5,1], index: 2, kind: input, shape index: {}]
  %s3 = inlined_call_operand.hbm [shape: f32[5,128], index: 3, kind: output, shape index: {}]
  %s4 = sld [smem:[#allocation0]]
  $region26: #{tpu_custom_call.1} parent=0
    _
  %s6 = ssub.s32 1, %s4
  %s7 = scalar_select 0, %s6, %s4
  $region1: #{tpu_custom_call.1} parent=0
    #allocation2 [shape = 'u8[8192]{0}', space=vmem, size = 0x2000, scoped, tag = 'input window, operand 0, single buffered']
    #allocation3 [shape = 's32[1]{0}', space=sflag, size = 0x4, scoped, tag = 'scoped memory for tpu_custom_call.1']
    #allocation4 [shape = 's32[1]{0}', space=sflag, size = 0x4, scoped, tag = 'scoped memory for tpu_custom_call.1']
    #allocation5 [shape = 'u8[4096]{0}', space=vmem, size = 0x1000, scoped, tag = 'output window, operand 0, single buffered']
    %8 = vsyncpa [#allocation3], 0
    %9 = vsyncpa [#allocation4], 0
    // Predicated region
    $region2: #{tpu_custom_call.1} parent=1 // pred_check
      _
    $region3: #{tpu_custom_call.1} parent=1 // pred_check_branch
      %11 = sbr.rel (0) target = $region5
    $region4: #{tpu_custom_call.1} parent=1 // pred_region
      %s13 = ssub.s32 256, 256
      %14 = vsyncadd [#allocation3], %s13
      %s15 = sshll.u32 [#allocation2], 4
      %s16 = int_to_ptr.vmem [resolvable:$true] %s15
      %21 = dma.hbm_to_vmem [thread:$0]  %s0, 256, %s16, [#allocation3], 128, 128, 8
    $region5: #{tpu_custom_call.1} parent=1 // pred_fallthru
      _
    // Predicated region
    $region6: #{tpu_custom_call.1} parent=1 // pred_check
      _
    $region7: #{tpu_custom_call.1} parent=1 // pred_check_branch
      %23 = sbr.rel (0) target = $region9
    $region8: #{tpu_custom_call.1} parent=1 // pred_region
      _
    $region9: #{tpu_custom_call.1} parent=1 // pred_fallthru
      _
    // Predicated region
    $region10: #{tpu_custom_call.1} parent=1 // pred_check
      _
    $region11: #{tpu_custom_call.1} parent=1 // pred_check_branch
      %25 = sbr.rel (0) target = $region13
    $region12: #{tpu_custom_call.1} parent=1 // pred_region
      _
    $region13: #{tpu_custom_call.1} parent=1 // pred_fallthru
      _
    // Predicated region
    $region14: #{tpu_custom_call.1} parent=1 // pred_check
      _
    $region15: #{tpu_custom_call.1} parent=1 // pred_check_branch
      %27 = sbr.rel (0) target = $region17
    $region16: #{tpu_custom_call.1} parent=1 // pred_region
      %28 = dma.done [#allocation3], 256
    $region17: #{tpu_custom_call.1} parent=1 // pred_fallthru
      _
    %v29 = vld [vmem:[%s1] sm:$0x1f]
    %v30 = vld [vmem:[#allocation2] sm:$0xff]
    %v31 = vld [vmem:[#allocation2 + $0x8] sm:$0x3]
    %v32 = vld [vmem:[%s2] sm:$0x1f]
    %34 = vset.pattern.permute.xlu0 0
    %35 = vperm.xlu0 %34, %v32
    %v36 = vpop.permute.xlu0 %35
    %vm38 = vcmask 80896
    %v40 = vsel %vm38, %v29, 0
    %vm42 = vcmask 1041408
    %v44 = vsel %vm42, %v31, 0
    %46 = vmatprep.subr.mxu0 0.0
    %47 = vmatpush1.msra.mxu0 0.0
    %48 = vmatprep.subr.mxu0 0.0
    %49 = vmatpush1.msra.mxu0 0.0
    %50 = vmatprep.subr.mxu0 0.0
    %51 = vmatpush1.msra.mxu0 0.0
    %52 = vmatprep.subr.mxu0 0.0
    %53 = vmatpush1.msra.mxu0 0.0
    %54 = vmatprep.subr.mxu0 0.0
    %55 = vmatpush1.msra.mxu0 0.0
    %56 = vmatprep.subr.mxu0 0.0
    %57 = vmatpush1.msra.mxu0 0.0
    %58 = vmatprep.subr.mxu0 0.0
    %59 = vmatpush1.msra.mxu0 0.0
    %60 = vmatprep.subr.mxu0 0.0
    %61 = vmatpush1.msra.mxu0 0.0
    %62 = vmatprep.subr.mxu0 0.0
    %63 = vmatpush1.msra.mxu0 0.0
    %64 = vmatprep.subr.mxu0 0.0
    %65 = vmatpush1.msra.mxu0 0.0
    %66 = vmatprep.subr.mxu0 0.0
    %67 = vmatpush1.msra.mxu0 0.0
    %68 = vmatprep.subr.mxu0 0.0
    %69 = vmatpush1.msra.mxu0 0.0
    %70 = vmatprep.subr.mxu0 0.0
    %71 = vmatpush1.msra.mxu0 0.0
    %72 = vmatprep.subr.mxu0 0.0
    %73 = vmatpush1.msra.mxu0 0.0
    %74 = vmatprep.subr.mxu0 0.0
    %75 = vmatpush1.msra.mxu0 %v44
    %76 = vmatprep.subr.mxu0 0.0
    %77 = vmatpush1.msra.mxu0 %v30
    %78 = vmatprep.subr.mxu0 0.0
    %79 = vmatpush2.msra.mxu0 0.0
    %80 = vmatprep.subr.mxu0 0.0
    %81 = vmatpush2.msra.mxu0 0.0
    %82 = vmatprep.subr.mxu0 0.0
    %83 = vmatpush2.msra.mxu0 0.0
    %84 = vmatprep.subr.mxu0 0.0
    %85 = vmatpush2.msra.mxu0 0.0
    %86 = vmatprep.subr.mxu0 0.0
    %87 = vmatpush2.msra.mxu0 0.0
    %88 = vmatprep.subr.mxu0 0.0
    %89 = vmatpush2.msra.mxu0 0.0
    %90 = vmatprep.subr.mxu0 0.0
    %91 = vmatpush2.msra.mxu0 0.0
    %92 = vmatprep.subr.mxu0 0.0
    %93 = vmatpush2.msra.mxu0 0.0
    %94 = vmatprep.subr.mxu0 0.0
    %95 = vmatpush2.msra.mxu0 0.0
    %96 = vmatprep.subr.mxu0 0.0
    %97 = vmatpush2.msra.mxu0 0.0
    %98 = vmatprep.subr.mxu0 0.0
    %99 = vmatpush2.msra.mxu0 0.0
    %100 = vmatprep.subr.mxu0 0.0
    %101 = vmatpush2.msra.mxu0 0.0
    %102 = vmatprep.subr.mxu0 0.0
    %103 = vmatpush2.msra.mxu0 0.0
    %104 = vmatprep.subr.mxu0 0.0
    %105 = vmatpush2.msra.mxu0 0.0
    %106 = vmatprep.subr.mxu0 0.0
    %107 = vmatpush2.msra.mxu0 0.0
    %108 = vmatprep.subr.mxu0 0.0
    %109 = vmatpush2.msra.mxu0 0.0
    %110 = vmatprep.mubr.f32.mxu0 0.0
    %111 = vmatmul.mubr.f32.gmra.mxu0 %v40
    %v112 = vpop.f32.mrf.mxu0
    %v113 = vadd.f32 %v36, %v112
    %v114 = vpop.f32.mrf.mxu0
    %115 = vdwg.mxu0
    %116 = vst [vmem:[#allocation5] sm:$0x1f] %v113
    // Predicated region
    $region18: #{tpu_custom_call.1} parent=1 // pred_check
      _
    $region19: #{tpu_custom_call.1} parent=1 // pred_check_branch
      %118 = sbr.rel (0) target = $region21
    $region20: #{tpu_custom_call.1} parent=1 // pred_region
      %s120 = ssub.s32 128, 128
      %121 = vsyncadd [#allocation4], %s120
      %s123 = sshll.u32 [#allocation5], 4
      %s124 = int_to_ptr.vmem [resolvable:$true] %s123
      %126 = dma.vmem_to_hbm [thread:$0]  %s124, 128, %s3, [#allocation4]
    $region21: #{tpu_custom_call.1} parent=1 // pred_fallthru
      _
    // Predicated region
    $region22: #{tpu_custom_call.1} parent=1 // pred_check
      _
    $region23: #{tpu_custom_call.1} parent=1 // pred_check_branch
      %128 = sbr.rel (0) target = $region25
    $region24: #{tpu_custom_call.1} parent=1 // pred_region
      %129 = dma.done [#allocation4], 128
    $region25: #{tpu_custom_call.1} parent=1 // pred_fallthru
      _
    %130 = vsyncpa [#allocation3], 1
    %131 = vsyncpa [#allocation4], 1

</llo_original>
